<compile_context>
chip_gen: v6e
topology: v6e:2x2x1
jax: 0.10.0
libtpu: 0.0.40
codegen_flags: <defaults>
</compile_context>

<pallas_src>
import jax
import jax.numpy as jnp
from jax import lax
from jax.experimental import pallas as pl
from jax.experimental.pallas import tpu as pltpu

EPS = 1e-5


def _ln_kernel(x_ref, w_ref, b_ref, o_ref):
    # x_ref/o_ref: (bt, D, tile_t)   w_ref/b_ref: (D, 1)
    x = x_ref[...].astype(jnp.float32)                       # (bt, D, tile_t)
    d = x.shape[-2]
    inv_d = jnp.float32(1.0 / d)

    # Two-pass statistics over the D (sublane) axis: mean, then variance of
    # the centered values (matches PyTorch LayerNorm's biased variance).
    mean = jnp.sum(x, axis=-2, keepdims=True) * inv_d        # (bt, 1, tile_t)
    xc = x - mean
    var = jnp.sum(xc * xc, axis=-2, keepdims=True) * inv_d
    inv = lax.rsqrt(var + EPS)                               # EUP slot

    w = w_ref[...].astype(jnp.float32)                       # (D, 1) -> bcast over T
    b = b_ref[...].astype(jnp.float32)
    y = xc * inv * w + b
    o_ref[...] = y.astype(o_ref.dtype)


def _largest_divisor_leq(n, cap):
    cap = max(1, min(n, cap))
    for d in range(cap, 0, -1):
        if n % d == 0:
            return d
    return 1


def _vmem_budgets():
    """(block budget bytes, scoped vmem limit bytes), derived from HW if possible."""
    try:
        cap = pltpu.get_tpu_info().vmem_capacity_bytes
    except Exception:
        cap = 64 * 1024 * 1024            # assume the smallest (v7x) if unknown
    if cap <= 64 * 1024 * 1024:           # v7x: 64 MiB per TensorCore
        return 12 * 1024 * 1024, 48 * 1024 * 1024
    # v5e / v6e: 128 MiB physical
    return 24 * 1024 * 1024, 64 * 1024 * 1024


def _choose_blocking(B, D, T, itemsize, budget_bytes):
    """Pick (bt, tile_t) for block (bt, D, tile_t).

    Budget counts double-buffered input + output blocks (itemsize each) plus
    ~3 f32 in-kernel temporaries per element.
    """
    bytes_per_elem = 4 * itemsize + 12
    max_elems = max(budget_bytes // bytes_per_elem, D * 128)

    row_elems = D * T
    if row_elems <= max_elems:
        # Full-T (lane-dense when T >= 128) block; grow over batch toward a
        # bigger per-step DMA, but keep >= 2 grid steps when B > 1 so both
        # v7x TensorCores get work.
        cap_bt = max(1, max_elems // row_elems)
        if B > 1:
            cap_bt = min(cap_bt, max(1, B // 2))
        bt = _largest_divisor_leq(B, cap_bt)
        tile_t = T
    else:
        bt = 1
        cap_t = max(128, (max_elems // D) // 128 * 128)
        tile_t = min(cap_t, ((T + 127) // 128) * 128)
        # Last T tile may be partial; Pallas masks the writeback (safe: the
        # reduction is along D, never across T).
    return bt, tile_t


def layer_norm_module(x, weight, bias):
    """Equivalent of the PyTorch module forward.

    x:      (B, C, F, T)
    weight: (C, F)
    bias:   (C, F)
    returns (B, C, F, T)
    """
    B, C, F, T = x.shape
    D = C * F

    # Metadata-only reshape for row-major contiguous inputs: (B,C,F,T)->(B,D,T).
    x3d = x.reshape(B, D, T)
    w2d = weight.reshape(D, 1)
    b2d = bias.reshape(D, 1)

    itemsize = jnp.dtype(x.dtype).itemsize
    budget_bytes, vmem_limit_bytes = _vmem_budgets()
    bt, tile_t = _choose_blocking(B, D, T, itemsize, budget_bytes)

    grid = (B // bt, pl.cdiv(T, tile_t))

    y3d = pl.pallas_call(
        _ln_kernel,
        out_shape=jax.ShapeDtypeStruct((B, D, T), x.dtype),
        grid_spec=pltpu.PrefetchScalarGridSpec(
            num_scalar_prefetch=0,
            grid=grid,
            in_specs=[
                pl.BlockSpec((bt, D, tile_t), lambda i, j: (i, 0, j)),
                pl.BlockSpec((D, 1), lambda i, j: (0, 0)),   # resident params
                pl.BlockSpec((D, 1), lambda i, j: (0, 0)),
            ],
            out_specs=pl.BlockSpec((bt, D, tile_t), lambda i, j: (i, 0, j)),
        ),
        compiler_params=pltpu.CompilerParams(
            dimension_semantics=("parallel", "parallel"),
            vmem_limit_bytes=vmem_limit_bytes,
        ),
    )(x3d, w2d, b2d)

    return y3d.reshape(B, C, F, T)


def _reference(x, weight, bias):
    # Pure-JAX reference of nn.LayerNorm([C, F]) applied over (C, F) per (b, t).
    xp = jnp.transpose(x, (0, 3, 1, 2)).astype(jnp.float32)   # (B, T, C, F)
    mean = jnp.mean(xp, axis=(-2, -1), keepdims=True)
    var = jnp.mean((xp - mean) ** 2, axis=(-2, -1), keepdims=True)
    y = (xp - mean) / jnp.sqrt(var + EPS) * weight + bias
    return jnp.transpose(y, (0, 2, 3, 1)).astype(x.dtype)


if __name__ == "__main__":
    key = jax.random.PRNGKey(0)
    B, C, F, T = 2, 4, 16, 16
    kx, kw, kb = jax.random.split(key, 3)

    x = jax.random.normal(kx, (B, C, F, T), dtype=jnp.float32)
    # PyTorch default params are ones/zeros; perturb so the affine path is exercised.
    weight = 1.0 + 0.1 * jax.random.normal(kw, (C, F), dtype=jnp.float32)
    bias = 0.1 * jax.random.normal(kb, (C, F), dtype=jnp.float32)

    out = layer_norm_module(x, weight, bias)
    out = jax.block_until_ready(out)

    ref = _reference(x, weight, bias)
    assert out.shape == (B, C, F, T)
    assert jnp.allclose(out, ref, atol=2e-5, rtol=1e-5)
    print("KERNEL_OK")
</pallas_src>

<mosaic_0001>
module attributes {stable_mosaic.version = 11 : i64} {
  func.func @_ln_kernel(%arg0: i32, %arg1: i32, %arg2: memref<1x64x16xf32, #tpu.memory_space<vmem>>, %arg3: memref<64x1xf32, #tpu.memory_space<vmem>>, %arg4: memref<64x1xf32, #tpu.memory_space<vmem>>, %arg5: memref<1x64x16xf32, #tpu.memory_space<vmem>>) attributes {dimension_semantics = [#tpu.dimension_semantics<parallel>, #tpu.dimension_semantics<parallel>], iteration_bounds = array<i64: 2, 1>, scalar_prefetch = 0 : i64, scratch_operands = 0 : i64, tpu.core_type = #tpu.core_type<tc>, window_params = [{transform_indices = @transform_0, window_bounds = array<i64: 1, 64, 16>}, {pipeline_mode = #tpu.pipeline_mode<synchronous>, transform_indices = @transform_1, window_bounds = array<i64: 64, 1>}, {pipeline_mode = #tpu.pipeline_mode<synchronous>, transform_indices = @transform_2, window_bounds = array<i64: 64, 1>}, {transform_indices = @transform_3, window_bounds = array<i64: 1, 64, 16>}]} {
    %c0 = arith.constant 0 : index
    %c0_0 = arith.constant 0 : index
    %c0_1 = arith.constant 0 : index
    %0 = vector.load %arg2[%c0, %c0_0, %c0_1] : memref<1x64x16xf32, #tpu.memory_space<vmem>>, vector<1x64x16xf32>
    %cst = arith.constant dense<0.000000e+00> : vector<1x16xf32>
    %1 = vector.multi_reduction <add>, %0, %cst [1] : vector<1x64x16xf32> to vector<1x16xf32>
    %2 = vector.shape_cast %1 : vector<1x16xf32> to vector<1x1x16xf32>
    %cst_2 = arith.constant 1.562500e-02 : f32
    %3 = vector.broadcast %cst_2 : f32 to vector<1x1x16xf32>
    %4 = arith.mulf %2, %3 : vector<1x1x16xf32>
    %5 = vector.broadcast %4 : vector<1x1x16xf32> to vector<1x64x16xf32>
    %6 = arith.subf %0, %5 : vector<1x64x16xf32>
    %7 = arith.mulf %6, %6 : vector<1x64x16xf32>
    %cst_3 = arith.constant dense<0.000000e+00> : vector<1x16xf32>
    %8 = vector.multi_reduction <add>, %7, %cst_3 [1] : vector<1x64x16xf32> to vector<1x16xf32>
    %9 = vector.shape_cast %8 : vector<1x16xf32> to vector<1x1x16xf32>
    %cst_4 = arith.constant 1.562500e-02 : f32
    %10 = vector.broadcast %cst_4 : f32 to vector<1x1x16xf32>
    %11 = arith.mulf %9, %10 : vector<1x1x16xf32>
    %cst_5 = arith.constant 9.99999974E-6 : f32
    %12 = vector.broadcast %cst_5 : f32 to vector<1x1x16xf32>
    %13 = arith.addf %11, %12 : vector<1x1x16xf32>
    %14 = math.rsqrt %13 : vector<1x1x16xf32>
    %c0_6 = arith.constant 0 : index
    %c0_7 = arith.constant 0 : index
    %15 = vector.load %arg3[%c0_6, %c0_7] : memref<64x1xf32, #tpu.memory_space<vmem>>, vector<64x1xf32>
    %c0_8 = arith.constant 0 : index
    %c0_9 = arith.constant 0 : index
    %16 = vector.load %arg4[%c0_8, %c0_9] : memref<64x1xf32, #tpu.memory_space<vmem>>, vector<64x1xf32>
    %17 = vector.broadcast %14 : vector<1x1x16xf32> to vector<1x64x16xf32>
    %18 = arith.mulf %6, %17 : vector<1x64x16xf32>
    %19 = vector.shape_cast %15 : vector<64x1xf32> to vector<1x64x1xf32>
    %20 = vector.broadcast %19 : vector<1x64x1xf32> to vector<1x64x16xf32>
    %21 = arith.mulf %18, %20 : vector<1x64x16xf32>
    %22 = vector.shape_cast %16 : vector<64x1xf32> to vector<1x64x1xf32>
    %23 = vector.broadcast %22 : vector<1x64x1xf32> to vector<1x64x16xf32>
    %24 = arith.addf %21, %23 : vector<1x64x16xf32>
    %c0_10 = arith.constant 0 : index
    %c0_11 = arith.constant 0 : index
    %c0_12 = arith.constant 0 : index
    %25 = vector.load %arg5[%c0_10, %c0_11, %c0_12] : memref<1x64x16xf32, #tpu.memory_space<vmem>>, vector<1x64x16xf32>
    tpu.vector_store %arg5[%c0_10, %c0_11, %c0_12], %24 {strides = array<i32>} : memref<1x64x16xf32, #tpu.memory_space<vmem>>, vector<1x64x16xf32>,
    return
  }
  func.func @transform_0(%arg0: i32, %arg1: i32) -> (i32, i32, i32) {
    %c0_i32 = arith.constant 0 : i32
    %c0_i32_0 = arith.constant 0 : i32
    return %arg0, %c0_i32, %arg1 : i32, i32, i32
  }
  func.func @transform_1(%arg0: i32, %arg1: i32) -> (i32, i32) {
    %c0_i32 = arith.constant 0 : i32
    %c0_i32_0 = arith.constant 0 : i32
    %c0_i32_1 = arith.constant 0 : i32
    return %c0_i32, %c0_i32_0 : i32, i32
  }
  func.func @transform_2(%arg0: i32, %arg1: i32) -> (i32, i32) {
    %c0_i32 = arith.constant 0 : i32
    %c0_i32_0 = arith.constant 0 : i32
    %c0_i32_1 = arith.constant 0 : i32
    return %c0_i32, %c0_i32_0 : i32, i32
  }
  func.func @transform_3(%arg0: i32, %arg1: i32) -> (i32, i32, i32) {
    %c0_i32 = arith.constant 0 : i32
    %c0_i32_0 = arith.constant 0 : i32
    return %arg0, %c0_i32, %arg1 : i32, i32, i32
  }
}

</mosaic_0001>

<llo_original>
// kernel: tpu_custom_call.1
$region0: #{tpu_custom_call.1}
  #allocation0 [shape = 'u32[]', space=smem, size = 0x4, offset = 0x4, fixed_abs, tag = 'smem constant byte address 0x4 - core index']
  #allocation1 [shape = 'u32[144,128]{1,0:T(1,128)}', space=vmem, size = 0x12000, scoped, tag = 'internal scratch']
  %s0 = inlined_call_operand.vmem [shape: f32[2,64,16], index: 0, kind: input, shape index: {}]
  %s1 = inlined_call_operand.vmem [shape: f32[64,1], index: 1, kind: input, shape index: {}]
  %s2 = inlined_call_operand.vmem [shape: f32[64,1], index: 2, kind: input, shape index: {}]
  %s3 = inlined_call_operand.vmem [shape: f32[2,64,16], index: 3, kind: output, shape index: {}]
  %s4 = sld [smem:[#allocation0]]
  $region45: #{tpu_custom_call.1} parent=0
    _
  %s6 = ssub.s32 1, %s4
  %s7 = scalar_select 0, %s6, %s4
  loop: start=0, step=1, limit=4
  $region2: #{tpu_custom_call.1} parent=0 // loop_pre_header
    _
  $region3: #{tpu_custom_call.1} parent=0 // loop_header
    %s9 = sphi 0, %s13
    %p10 = scmp.ge.s32.totalorder %s9, 4
    %s16 = sphi 0, %s28
    %s17 = sphi 0, %s24
    %s18 = sphi 0, %s16
    %s19 = sphi 0, %s17
    %s20 = sphi 0, %s18
    %s21 = sphi 0, %s19
    %s33 = sphi 0, %s35
    %s36 = sphi 0, %s33
    %s37 = sphi 0, %s36
    %s53 = sphi 0, %s37
    %s57 = sphi 0, %s57
    %s59 = sphi 0, %s57
    %s60 = sphi 0, %s59
    %s74 = sphi 0, %s60
    %s78 = sphi 0, %s78
    %s80 = sphi 0, %s78
    %s81 = sphi 0, %s80
    %s95 = sphi 0, %s81
    %s103 = sphi 0, %s105
    %s106 = sphi 0, %s103
    %s107 = sphi 0, %s106
    %s123 = sphi 0, %s107
  $region4: #{tpu_custom_call.1} parent=0 // loop_header_branch
    %12 = sbr.rel (%p10) target = $region8
  $region5: #{tpu_custom_call.1} parent=0 // loop_body
    %s14 = ssub.s32 %s9, 1
    %s15 = ssub.s32 %s9, 2
    %s22 = sadd.s32 1, %s17
    %p23 = scmp.ge.s32.totalorder %s22, 1
    %s24 = scalar_select %p23, 0, %s22
    %s25 = sadd.s32 1, %s16
    %s26 = scalar_select %p23, %s25, %s16
    %p27 = scmp.ge.s32.totalorder %s26, 2
    %s28 = scalar_select %p27, 0, %s26
    %s29 = ssub.s32 %s16, %s28
    %s30 = ssub.s32 %s17, %s24
    %s31 = sor.u32 %s29, %s30
    %p32 = scmp.eq.s32.totalorder %s31, 0
    %s34 = sadd.s32 %s33, 1
    %s35 = scalar_select %p32, %s33, %s34
    %p38 = pneg %p32
    %p39 = scmp.eq.s32.totalorder %s9, 1
    %p40 = por %p38, %p39
    %p41 = scmp.ne.s32.totalorder %s33, %s36
    %p42 = scmp.eq.s32.totalorder %s9, 0
    %p43 = por %p41, %p42
    %p44 = scmp.ne.s32.totalorder %s33, %s36
    %p45 = scmp.eq.s32.totalorder %s14, 1
    %p46 = por %p44, %p45
    %p47 = scmp.ne.s32.totalorder %s36, %s37
    %p48 = scmp.eq.s32.totalorder %s14, 0
    %p49 = por %p47, %p48
    %p50 = scmp.ne.s32.totalorder %s36, %s37
    %p51 = scmp.eq.s32.totalorder %s15, 1
    %p52 = por %p50, %p51
    %p54 = scmp.ne.s32.totalorder %s37, %s53
    %p55 = scmp.eq.s32.totalorder %s15, 0
    %p56 = por %p54, %p55
    %s58 = sadd.s32 %s57, 1
    %p61 = scmp.eq.s32.totalorder %s9, 1
    %p62 = scmp.ne.s32.totalorder %s57, %s59
    %p63 = scmp.eq.s32.totalorder %s9, 0
    %p64 = por %p62, %p63
    %p65 = scmp.ne.s32.totalorder %s57, %s59
    %p66 = scmp.eq.s32.totalorder %s14, 1
    %p67 = por %p65, %p66
    %p68 = scmp.ne.s32.totalorder %s59, %s60
    %p69 = scmp.eq.s32.totalorder %s14, 0
    %p70 = por %p68, %p69
    %p71 = scmp.ne.s32.totalorder %s59, %s60
    %p72 = scmp.eq.s32.totalorder %s15, 1
    %p73 = por %p71, %p72
    %p75 = scmp.ne.s32.totalorder %s60, %s74
    %p76 = scmp.eq.s32.totalorder %s15, 0
    %p77 = por %p75, %p76
    %s79 = sadd.s32 %s78, 1
    %p82 = scmp.eq.s32.totalorder %s9, 1
    %p83 = scmp.ne.s32.totalorder %s78, %s80
    %p84 = scmp.eq.s32.totalorder %s9, 0
    %p85 = por %p83, %p84
    %p86 = scmp.ne.s32.totalorder %s78, %s80
    %p87 = scmp.eq.s32.totalorder %s14, 1
    %p88 = por %p86, %p87
    %p89 = scmp.ne.s32.totalorder %s80, %s81
    %p90 = scmp.eq.s32.totalorder %s14, 0
    %p91 = por %p89, %p90
    %p92 = scmp.ne.s32.totalorder %s80, %s81
    %p93 = scmp.eq.s32.totalorder %s15, 1
    %p94 = por %p92, %p93
    %p96 = scmp.ne.s32.totalorder %s81, %s95
    %p97 = scmp.eq.s32.totalorder %s15, 0
    %p98 = por %p96, %p97
    %s99 = ssub.s32 %s16, %s28
    %s100 = ssub.s32 %s17, %s24
    %s101 = sor.u32 %s99, %s100
    %p102 = scmp.eq.s32.totalorder %s101, 0
    %s104 = sadd.s32 %s103, 1
    %s105 = scalar_select %p102, %s103, %s104
    %p108 = pneg %p102
    %p109 = scmp.eq.s32.totalorder %s9, 1
    %p110 = por %p108, %p109
    %p111 = scmp.ne.s32.totalorder %s103, %s106
    %p112 = scmp.eq.s32.totalorder %s9, 0
    %p113 = por %p111, %p112
    %p114 = scmp.ne.s32.totalorder %s103, %s106
    %p115 = scmp.eq.s32.totalorder %s14, 1
    %p116 = por %p114, %p115
    %p117 = scmp.ne.s32.totalorder %s106, %s107
    %p118 = scmp.eq.s32.totalorder %s14, 0
    %p119 = por %p117, %p118
    %p120 = scmp.ne.s32.totalorder %s106, %s107
    %p121 = scmp.eq.s32.totalorder %s15, 1
    %p122 = por %p120, %p121
    %p124 = scmp.ne.s32.totalorder %s107, %s123
    %p125 = scmp.eq.s32.totalorder %s15, 0
    %p126 = por %p124, %p125
    %p127 = scmp.le.s32.totalorder 1, %s9
    %p128 = scmp.lt.s32.totalorder %s9, 3
    %p129 = pnand %p127, %p128
    %p130 = pneg %p129
    // Predicated region
    $region9: #{tpu_custom_call.1} parent=5 // pred_check
      _
    $region10: #{tpu_custom_call.1} parent=5 // pred_check_branch
      %132 = sbr.rel (%p129) target = $region12
    $region11: #{tpu_custom_call.1} parent=5 // pred_region
      %s133 = ssub.s32 %s9, 1
      // Predicated region
      $region13: #{tpu_custom_call.1} parent=11 // pred_check
        %p134 = pneg %p70
      $region14: #{tpu_custom_call.1} parent=11 // pred_check_branch
        %136 = sbr.rel (%p134) target = $region16
      $region15: #{tpu_custom_call.1} parent=11 // pred_region
        _
      $region16: #{tpu_custom_call.1} parent=11 // pred_fallthru
        _
      // Predicated region
      $region17: #{tpu_custom_call.1} parent=11 // pred_check
        %p137 = pneg %p91
      $region18: #{tpu_custom_call.1} parent=11 // pred_check_branch
        %139 = sbr.rel (%p137) target = $region20
      $region19: #{tpu_custom_call.1} parent=11 // pred_region
        _
      $region20: #{tpu_custom_call.1} parent=11 // pred_fallthru
        _
    $region12: #{tpu_custom_call.1} parent=5 // pred_fallthru
      _
    %p140 = scmp.lt.s32.totalorder %s9, 2
    // Predicated region
    $region21: #{tpu_custom_call.1} parent=5 // pred_check
      %p141 = pneg %p140
    $region22: #{tpu_custom_call.1} parent=5 // pred_check_branch
      %143 = sbr.rel (%p141) target = $region24
    $region23: #{tpu_custom_call.1} parent=5 // pred_region
      // Predicated region
      $region25: #{tpu_custom_call.1} parent=23 // pred_check
        %p144 = pneg %p43
      $region26: #{tpu_custom_call.1} parent=23 // pred_check_branch
        %146 = sbr.rel (%p144) target = $region28
      $region27: #{tpu_custom_call.1} parent=23 // pred_region
        %p147 = scmp.lt.s32.totalorder %s16, 1
        %s148 = scalar_select %p147, %s16, 1
        %p149 = scmp.lt.s32.totalorder %s17, 0
        %s150 = scalar_select %p149, %s17, 0
        %s151 = smul.addr %s148, 8
        %s152 = sadd.s32 %s150, %s151
        %s153 = smul.addr %s152, 8
        %s154 = scalar_lea.vmem %s0, %s153
      $region28: #{tpu_custom_call.1} parent=23 // pred_fallthru
        _
    $region24: #{tpu_custom_call.1} parent=5 // pred_fallthru
      _
    %p155 = scmp.le.s32.totalorder 1, %s9
    %p156 = scmp.lt.s32.totalorder %s9, 3
    %p157 = pnand %p155, %p156
    %p158 = pneg %p157
    // Predicated region
    $region29: #{tpu_custom_call.1} parent=5 // pred_check
      _
    $region30: #{tpu_custom_call.1} parent=5 // pred_check_branch
      %160 = sbr.rel (%p157) target = $region32
    $region31: #{tpu_custom_call.1} parent=5 // pred_region
      %s161 = ssub.s32 %s9, 1
      %p162 = scmp.lt.s32.totalorder %s18, 1
      %s163 = scalar_select %p162, %s18, 1
      %p164 = scmp.lt.s32.totalorder %s19, 0
      %s165 = scalar_select %p164, %s19, 0
      %s166 = smul.addr %s163, 8
      %s167 = sadd.s32 %s165, %s166
      %s168 = smul.addr %s167, 8
      %s169 = scalar_lea.vmem %s0, %s168
      %p170 = pneg %p49
      %p171 = pneg %p46
      %p172 = pneg %p70
      %p173 = pneg %p67
      %p174 = pneg %p91
      %p175 = pneg %p88
      %p176 = pneg %p119
      %p177 = pneg %p116
      %p178 = scmp.lt.s32.totalorder %s18, 1
      %s179 = scalar_select %p178, %s18, 1
      %p180 = scmp.lt.s32.totalorder %s19, 0
      %s181 = scalar_select %p180, %s19, 0
      %s182 = smul.addr %s179, 8
      %s183 = sadd.s32 %s181, %s182
      %s184 = smul.addr %s183, 8
      %s185 = scalar_lea.vmem %s3, %s184
      %p186 = scmp.lt.s32.totalorder %s18, 1
      %s187 = scalar_select %p186, %s18, 1
      %p188 = scmp.lt.s32.totalorder %s19, 0
      %s189 = scalar_select %p188, %s19, 0
      %s190 = smul.addr %s187, 8
      %s191 = sadd.s32 %s189, %s190
      %s192 = smul.addr %s191, 8
      %s193 = scalar_lea.vmem %s0, %s192
      %p194 = scmp.lt.s32.totalorder %s18, 1
      %s195 = scalar_select %p194, %s18, 1
      %p196 = scmp.lt.s32.totalorder %s19, 0
      %s197 = scalar_select %p196, %s19, 0
      %s198 = smul.addr %s195, 8
      %s199 = sadd.s32 %s197, %s198
      %s200 = smul.addr %s199, 8
      %s201 = scalar_lea.vmem %s3, %s200
      %v202 = vld [vmem:[%s193] sm:$0xff]
      %v203 = vld [vmem:[%s193 + $0x8] sm:$0xff]
      %v204 = vld [vmem:[%s193 + $0x10] sm:$0xff]
      %v205 = vld [vmem:[%s193 + $0x18] sm:$0xff]
      %v206 = vld [vmem:[%s193 + $0x20] sm:$0xff]
      %v207 = vld [vmem:[%s193 + $0x28] sm:$0xff]
      %v208 = vld [vmem:[%s193 + $0x30] sm:$0xff]
      %v209 = vld [vmem:[%s193 + $0x38] sm:$0xff]
      %vm210 = vcmask 130048
      %v211 = vsel %vm210, %v202, 0.0
      %v212 = vsel %vm210, %v203, 0.0
      %v213 = vadd.f32 %v211, %v212
      %v214 = vsel %vm210, %v204, 0.0
      %v215 = vadd.f32 %v213, %v214
      %v216 = vsel %vm210, %v205, 0.0
      %v217 = vadd.f32 %v215, %v216
      %v218 = vsel %vm210, %v206, 0.0
      %v219 = vadd.f32 %v217, %v218
      %v220 = vsel %vm210, %v207, 0.0
      %v221 = vadd.f32 %v219, %v220
      %v222 = vsel %vm210, %v208, 0.0
      %v223 = vadd.f32 %v221, %v222
      %v224 = vsel %vm210, %v209, 0.0
      %v225 = vadd.f32 %v223, %v224
      %v226 = vrot.slane %v225, 4
      %v227 = vadd.f32 %v225, %v226
      %v228 = vrot.slane %v227, 2
      %v229 = vadd.f32 %v227, %v228
      %v230 = vrot.slane %v229, 1
      %v231 = vadd.f32 %v229, %v230
      %v232 = vmul.f32 %v231, 0.015625
      %v233 = vsub.f32 %v202, %v232
      %v234 = vsub.f32 %v203, %v232
      %v235 = vsub.f32 %v204, %v232
      %v236 = vsub.f32 %v205, %v232
      %v237 = vsub.f32 %v206, %v232
      %v238 = vsub.f32 %v207, %v232
      %v239 = vsub.f32 %v208, %v232
      %v240 = vsub.f32 %v209, %v232
      %v241 = vmul.f32 %v233, %v233
      %v242 = vmul.f32 %v234, %v234
      %v243 = vmul.f32 %v235, %v235
      %v244 = vmul.f32 %v236, %v236
      %v245 = vmul.f32 %v237, %v237
      %v246 = vmul.f32 %v238, %v238
      %v247 = vmul.f32 %v239, %v239
      %v248 = vmul.f32 %v240, %v240
      %v249 = vsel %vm210, %v241, 0.0
      %v250 = vsel %vm210, %v242, 0.0
      %v251 = vadd.f32 %v249, %v250
      %v252 = vsel %vm210, %v243, 0.0
      %v253 = vadd.f32 %v251, %v252
      %v254 = vsel %vm210, %v244, 0.0
      %v255 = vadd.f32 %v253, %v254
      %v256 = vsel %vm210, %v245, 0.0
      %v257 = vadd.f32 %v255, %v256
      %v258 = vsel %vm210, %v246, 0.0
      %v259 = vadd.f32 %v257, %v258
      %v260 = vsel %vm210, %v247, 0.0
      %v261 = vadd.f32 %v259, %v260
      %v262 = vsel %vm210, %v248, 0.0
      %v263 = vadd.f32 %v261, %v262
      %v264 = vrot.slane %v263, 4
      %v265 = vadd.f32 %v263, %v264
      %v266 = vrot.slane %v265, 2
      %v267 = vadd.f32 %v265, %v266
      %v268 = vrot.slane %v267, 1
      %v269 = vadd.f32 %v267, %v268
      %v270 = vmul.f32 %v269, 0.015625
      %v271 = vadd.f32 %v270, 1e-05
      %v272 = vrsqrt.pop %v271
      %v273 = vld [vmem:[%s1] sm:$0xff]
      %v274 = vld [vmem:[%s1 + $0x8] sm:$0xff]
      %v275 = vld [vmem:[%s1 + $0x10] sm:$0xff]
      %v276 = vld [vmem:[%s1 + $0x18] sm:$0xff]
      %v277 = vld [vmem:[%s1 + $0x20] sm:$0xff]
      %v278 = vld [vmem:[%s1 + $0x28] sm:$0xff]
      %v279 = vld [vmem:[%s1 + $0x30] sm:$0xff]
      %v280 = vld [vmem:[%s1 + $0x38] sm:$0xff]
      %v281 = vld [vmem:[%s2] sm:$0xff]
      %v282 = vld [vmem:[%s2 + $0x8] sm:$0xff]
      %v283 = vld [vmem:[%s2 + $0x10] sm:$0xff]
      %v284 = vld [vmem:[%s2 + $0x18] sm:$0xff]
      %v285 = vld [vmem:[%s2 + $0x20] sm:$0xff]
      %v286 = vld [vmem:[%s2 + $0x28] sm:$0xff]
      %v287 = vld [vmem:[%s2 + $0x30] sm:$0xff]
      %v288 = vld [vmem:[%s2 + $0x38] sm:$0xff]
      %v289 = vmul.f32 %v233, %v272
      %v290 = vmul.f32 %v234, %v272
      %v291 = vmul.f32 %v235, %v272
      %v292 = vmul.f32 %v236, %v272
      %v293 = vmul.f32 %v237, %v272
      %v294 = vmul.f32 %v238, %v272
      %v295 = vmul.f32 %v239, %v272
      %v296 = vmul.f32 %v240, %v272
      %298 = vset.pattern.permute.xlu0 0
      %299 = vperm.xlu0 %298, %v273
      %v300 = vpop.permute.xlu0 %299
      %303 = vset.pattern.permute.xlu0 0
      %304 = vperm.xlu0 %303, %v274
      %v305 = vpop.permute.xlu0 %304
      %308 = vset.pattern.permute.xlu0 0
      %309 = vperm.xlu0 %308, %v275
      %v310 = vpop.permute.xlu0 %309
      %313 = vset.pattern.permute.xlu0 0
      %314 = vperm.xlu0 %313, %v276
      %v315 = vpop.permute.xlu0 %314
      %318 = vset.pattern.permute.xlu0 0
      %319 = vperm.xlu0 %318, %v277
      %v320 = vpop.permute.xlu0 %319
      %323 = vset.pattern.permute.xlu0 0
      %324 = vperm.xlu0 %323, %v278
      %v325 = vpop.permute.xlu0 %324
      %328 = vset.pattern.permute.xlu0 0
      %329 = vperm.xlu0 %328, %v279
      %v330 = vpop.permute.xlu0 %329
      %333 = vset.pattern.permute.xlu0 0
      %334 = vperm.xlu0 %333, %v280
      %v335 = vpop.permute.xlu0 %334
      %v337 = vmul.f32 %v289, %v300
      %v338 = vmul.f32 %v290, %v305
      %v339 = vmul.f32 %v291, %v310
      %v340 = vmul.f32 %v292, %v315
      %v341 = vmul.f32 %v293, %v320
      %v342 = vmul.f32 %v294, %v325
      %v343 = vmul.f32 %v295, %v330
      %v344 = vmul.f32 %v296, %v335
      %346 = vset.pattern.permute.xlu0 0
      %347 = vperm.xlu0 %346, %v281
      %v348 = vpop.permute.xlu0 %347
      %351 = vset.pattern.permute.xlu0 0
      %352 = vperm.xlu0 %351, %v282
      %v353 = vpop.permute.xlu0 %352
      %356 = vset.pattern.permute.xlu0 0
      %357 = vperm.xlu0 %356, %v283
      %v358 = vpop.permute.xlu0 %357
      %361 = vset.pattern.permute.xlu0 0
      %362 = vperm.xlu0 %361, %v284
      %v363 = vpop.permute.xlu0 %362
      %366 = vset.pattern.permute.xlu0 0
      %367 = vperm.xlu0 %366, %v285
      %v368 = vpop.permute.xlu0 %367
      %371 = vset.pattern.permute.xlu0 0
      %372 = vperm.xlu0 %371, %v286
      %v373 = vpop.permute.xlu0 %372
      %376 = vset.pattern.permute.xlu0 0
      %377 = vperm.xlu0 %376, %v287
      %v378 = vpop.permute.xlu0 %377
      %381 = vset.pattern.permute.xlu0 0
      %382 = vperm.xlu0 %381, %v288
      %v383 = vpop.permute.xlu0 %382
      %v385 = vadd.f32 %v337, %v348
      %v386 = vadd.f32 %v338, %v353
      %v387 = vadd.f32 %v339, %v358
      %v388 = vadd.f32 %v340, %v363
      %v389 = vadd.f32 %v341, %v368
      %v390 = vadd.f32 %v342, %v373
      %v391 = vadd.f32 %v343, %v378
      %v392 = vadd.f32 %v344, %v383
      %393 = vst.msk [vmem:[%s201] sm:$0xff] %vm210, %v385
      %394 = vst.msk [vmem:[%s201 + $0x8] sm:$0xff] %vm210, %v386
      %395 = vst.msk [vmem:[%s201 + $0x10] sm:$0xff] %vm210, %v387
      %396 = vst.msk [vmem:[%s201 + $0x18] sm:$0xff] %vm210, %v388
      %397 = vst.msk [vmem:[%s201 + $0x20] sm:$0xff] %vm210, %v389
      %398 = vst.msk [vmem:[%s201 + $0x28] sm:$0xff] %vm210, %v390
      %399 = vst.msk [vmem:[%s201 + $0x30] sm:$0xff] %vm210, %v391
      %400 = vst.msk [vmem:[%s201 + $0x38] sm:$0xff] %vm210, %v392
      %p401 = scmp.lt.s32.totalorder %s18, 1
      %s402 = scalar_select %p401, %s18, 1
      %p403 = scmp.lt.s32.totalorder %s19, 0
      %s404 = scalar_select %p403, %s19, 0
      %s405 = smul.addr %s402, 8
      %s406 = sadd.s32 %s404, %s405
      %s407 = smul.addr %s406, 8
      %s408 = scalar_lea.vmem %s3, %s407
      // Predicated region
      $region33: #{tpu_custom_call.1} parent=31 // pred_check
        %p409 = pneg %p116
      $region34: #{tpu_custom_call.1} parent=31 // pred_check_branch
        %411 = sbr.rel (%p409) target = $region36
      $region35: #{tpu_custom_call.1} parent=31 // pred_region
        _
      $region36: #{tpu_custom_call.1} parent=31 // pred_fallthru
        _
    $region32: #{tpu_custom_call.1} parent=5 // pred_fallthru
      _
    %p412 = scmp.le.s32.totalorder 2, %s9
    // Predicated region
    $region37: #{tpu_custom_call.1} parent=5 // pred_check
      %p413 = pneg %p412
    $region38: #{tpu_custom_call.1} parent=5 // pred_check_branch
      %415 = sbr.rel (%p413) target = $region40
    $region39: #{tpu_custom_call.1} parent=5 // pred_region
      %s416 = ssub.s32 %s9, 2
      // Predicated region
      $region41: #{tpu_custom_call.1} parent=39 // pred_check
        %p417 = pneg %p122
      $region42: #{tpu_custom_call.1} parent=39 // pred_check_branch
        %419 = sbr.rel (%p417) target = $region44
      $region43: #{tpu_custom_call.1} parent=39 // pred_region
        %p420 = scmp.lt.s32.totalorder %s20, 1
        %s421 = scalar_select %p420, %s20, 1
        %p422 = scmp.lt.s32.totalorder %s21, 0
        %s423 = scalar_select %p422, %s21, 0
        %s424 = smul.addr %s421, 8
        %s425 = sadd.s32 %s423, %s424
        %s426 = smul.addr %s425, 8
        %s427 = scalar_lea.vmem %s3, %s426
      $region44: #{tpu_custom_call.1} parent=39 // pred_fallthru
        _
    $region40: #{tpu_custom_call.1} parent=5 // pred_fallthru
      _
  $region6: #{tpu_custom_call.1} parent=0 // loop_footer
    %s13 = sadd.s32 1, %s9
  $region7: #{tpu_custom_call.1} parent=0 // loop_footer_branch
    %8 = sbr.rel target = $region3
  $region8: #{tpu_custom_call.1} parent=0 // loop_exit
    _

</llo_original>
